<compile_context>
chip_gen: v7x
topology: tpu7x:2x2x1
jax: 0.10.0
libtpu: 0.0.40
codegen_flags: <defaults>
</compile_context>

<pallas_src>
import functools
import math

import jax
import jax.numpy as jnp
import numpy as np
from jax.experimental import pallas as pl
from jax.experimental.pallas import tpu as pltpu

_LOG_2PI = float(np.log(2.0 * np.pi))


def _sigmoid(x):
    # Explicit logistic (exp + divide): unambiguous Mosaic lowering, EUP exp.
    return 1.0 / (1.0 + jnp.exp(-x))


# ----------------------------------------------------------------------------
# Kernel (single grid point; everything resident in VMEM, ~40 KB total)
# ----------------------------------------------------------------------------
def lstm_actor_kernel(x_ref, st_ref, w_ref, v_ref, o_ref, *, act_dim):
    """
    x_ref  : (T*Bp, OBS_PAD) bf16  time-major obs, batch padded to Bp, zero pad
    st_ref : (4*Bp, H)       f32   rows [0:Bp]=h0, [Bp:2Bp]=c0,
                                   [2Bp:3Bp]=act (cols 0:act_dim),
                                   [3Bp:4Bp]=terminal flag (broadcast over H)
    w_ref  : (OBS_PAD+3H, 4H) bf16 stacked pre-transposed weights:
                                   [0:OBS_PAD]      W_ih^T
                                   [OBS_PAD:+H]     W_hh^T
                                   [OBS_PAD+H:+2H]  W_hid^T (cols 0:H real)
                                   [OBS_PAD+2H:+3H] W_mu^T  (cols 0:act_dim real)
    v_ref  : (8, 4H) f32           row0 b_ih+b_hh, row1 b_hid, row2 b_mu,
                                   row3 log_std (cols 0:act_dim real)
    o_ref  : (Bp, 4H) f32          cols [0:H]=h_n, [H:2H]=c_n,
                                   [2H:2H+act_dim]=mu, [2H+act_dim]=logp, rest 0
    """
    Bp = o_ref.shape[0]
    H = st_ref.shape[1]
    obs_pad = x_ref.shape[1]
    T = x_ref.shape[0] // Bp
    f32 = jnp.float32
    bf16 = jnp.bfloat16

    # Static, sublane-aligned views into the packed slabs.
    w_ih = w_ref[0:obs_pad, :]                                # (OBS_PAD, 4H)
    w_hh = w_ref[obs_pad:obs_pad + H, :]                      # (H, 4H)
    w_hid = w_ref[obs_pad + H:obs_pad + 2 * H, :]             # (H, 4H) cols>=H are 0
    w_mu = w_ref[obs_pad + 2 * H:obs_pad + 3 * H, :]          # (H, 4H) cols>=act_dim are 0
    b_g = v_ref[0:1, :]                                       # (1, 4H)
    b_hid = v_ref[1:2, :]                                     # (1, 4H)
    b_mu = v_ref[2:3, :]                                      # (1, 4H)
    log_std = v_ref[3:4, 0:H]                                 # (1, H)

    # Initial state with terminal masking done in-kernel (free VPU muls).
    mask = 1.0 - st_ref[3 * Bp:4 * Bp, :]
    h = st_ref[0:Bp, :] * mask                                # (Bp, H) f32
    c = st_ref[Bp:2 * Bp, :] * mask                           # (Bp, H) f32

    # Hoisted input projection for all timesteps at once (bias folded in).
    xg = jnp.dot(x_ref[...], w_ih, preferred_element_type=f32) + b_g   # (T*Bp, 4H)

    # Fully-unrolled recurrence; Bp=8 makes every slice a full f32 sublane tile.
    for t in range(T):
        gates = xg[t * Bp:(t + 1) * Bp, :] + jnp.dot(
            h.astype(bf16), w_hh, preferred_element_type=f32)          # (Bp, 4H)
        sig_all = _sigmoid(gates)                                      # one EUP pass
        i_g = sig_all[:, 0 * H:1 * H]
        f_g = sig_all[:, 1 * H:2 * H]
        o_g = sig_all[:, 3 * H:4 * H]
        g_g = jnp.tanh(gates[:, 2 * H:3 * H])
        c = f_g * c + i_g * g_g
        h = o_g * jnp.tanh(c)

    # hidden_out = elu(Linear(h_n[-1]))   (alpha=1; exp(min(x,0))-1 form)
    hid = jnp.dot(h.astype(bf16), w_hid, preferred_element_type=f32) + b_hid   # (Bp, 4H)
    hid = jnp.where(hid > 0, hid, jnp.exp(jnp.minimum(hid, 0.0)) - 1.0)

    # mu = Linear(hidden_out); padded lanes (>= act_dim) are exactly zero.
    mu_full = jnp.dot(hid[:, 0:H].astype(bf16), w_mu,
                      preferred_element_type=f32) + b_mu                       # (Bp, 4H)

    # Normal(mu, exp(log_std)).log_prob(act).sum(-1)  (multiply by inv_std)
    act = st_ref[2 * Bp:3 * Bp, :]                                             # (Bp, H)
    inv_std = jnp.exp(-log_std)
    z = (act - mu_full[:, 0:H]) * inv_std
    terms = -0.5 * z * z - log_std - 0.5 * _LOG_2PI
    lane_h = jax.lax.broadcasted_iota(jnp.int32, (Bp, H), 1)
    logp = jnp.sum(jnp.where(lane_h < act_dim, terms, 0.0),
                   axis=-1, keepdims=True)                                     # (Bp, 1)

    # Single lane-dense output block: [ h | c | mu, logp, 0... ].
    tail_w = o_ref.shape[1] - 2 * H
    lane_t = jax.lax.broadcasted_iota(jnp.int32, (Bp, tail_w), 1)
    tail = jnp.where(lane_t == act_dim, logp, mu_full[:, 0:tail_w])            # (Bp, tail_w)
    o_ref[:, 0:H] = h
    o_ref[:, H:2 * H] = c
    o_ref[:, 2 * H:] = tail


# ----------------------------------------------------------------------------
# One-time parameter packing (per parameter update, NOT per forward call)
# ----------------------------------------------------------------------------
def prepare_actor_params(params):
    four_h, obs_dim = params["w_ih"].shape
    H = four_h // 4
    act_dim = params["w_mu"].shape[0]
    obs_pad = ((obs_dim + 15) // 16) * 16          # bf16 sublane pack = 16
    assert H % 16 == 0, "hidden size must be a multiple of 16"
    assert act_dim <= H, "act_dim must fit in the H-wide state slab"
    assert 4 * H >= 2 * H + act_dim + 1, "output packing needs 2H + act_dim + 1 lanes"

    w = jnp.zeros((obs_pad + 3 * H, 4 * H), jnp.float32)
    w = w.at[0:obs_dim, :].set(params["w_ih"].T)
    w = w.at[obs_pad:obs_pad + H, :].set(params["w_hh"].T)
    w = w.at[obs_pad + H:obs_pad + 2 * H, 0:H].set(params["w_hid"].T)
    w = w.at[obs_pad + 2 * H:obs_pad + 3 * H, 0:act_dim].set(params["w_mu"].T)

    v = jnp.zeros((8, 4 * H), jnp.float32)
    v = v.at[0, :].set(params["b_ih"] + params["b_hh"])
    v = v.at[1, 0:H].set(params["b_hid"])
    v = v.at[2, 0:act_dim].set(params["b_mu"])
    v = v.at[3, 0:act_dim].set(params["log_std"])

    return {
        "w_slab": w.astype(jnp.bfloat16),
        "v_slab": v,
        "std": jnp.exp(params["log_std"]),
    }


# ----------------------------------------------------------------------------
# Per-call wrapper
# ----------------------------------------------------------------------------
def lstm_gaussian_actor(obs, act, prepared, hidden_cell=None, terminal=None):
    """Returns (mu, std, logp_a, (h_n, c_n)).

    obs: (T, B, obs_dim) f32 (time-major, like nn.LSTM); act: (B, act_dim) f32.
    """
    T, B, obs_dim = obs.shape
    w_slab = prepared["w_slab"]
    v_slab = prepared["v_slab"]
    H = v_slab.shape[1] // 4
    act_dim = act.shape[1]
    obs_pad = w_slab.shape[0] - 3 * H
    Bp = max(8, ((B + 7) // 8) * 8)                # pad batch to f32 sublane tile

    # obs slab: (T*Bp, obs_pad) bf16, zero-padded batch rows / feature cols.
    x = jnp.pad(obs, ((0, 0), (0, Bp - B), (0, obs_pad - obs_dim)))
    x = x.reshape(T * Bp, obs_pad).astype(jnp.bfloat16)

    # dynamic state slab: h0 | c0 | act | terminal  (terminal mask applied in-kernel)
    st = jnp.zeros((4 * Bp, H), jnp.float32)
    if hidden_cell is not None:
        h0, c0 = hidden_cell
        st = st.at[0:B, :].set(h0.astype(jnp.float32))
        st = st.at[Bp:Bp + B, :].set(c0.astype(jnp.float32))
    st = st.at[2 * Bp:2 * Bp + B, 0:act_dim].set(act.astype(jnp.float32))
    if terminal is not None:
        st = st.at[3 * Bp:3 * Bp + B, :].set(
            jnp.broadcast_to(terminal.reshape(B, 1).astype(jnp.float32), (B, H)))

    vmem = pl.BlockSpec(memory_space=pltpu.MemorySpace.VMEM)
    out = pl.pallas_call(
        functools.partial(lstm_actor_kernel, act_dim=act_dim),
        out_shape=jax.ShapeDtypeStruct((Bp, 4 * H), jnp.float32),
        in_specs=[vmem, vmem, vmem, vmem],
        out_specs=vmem,
    )(x, st, w_slab, v_slab)

    hn = out[:B, 0:H]
    cn = out[:B, H:2 * H]
    mu = out[:B, 2 * H:2 * H + act_dim]
    logp = out[:B, 2 * H + act_dim]
    return mu, prepared["std"], logp, (hn, cn)


# ----------------------------------------------------------------------------
# Pure-JAX references
# ----------------------------------------------------------------------------
def reference_forward_f32(obs, act, params):
    """Straight f32 reference matching the PyTorch module."""
    T, B, _ = obs.shape
    H = params["w_hh"].shape[1]
    h = jnp.zeros((B, H), jnp.float32)
    c = jnp.zeros((B, H), jnp.float32)
    b = params["b_ih"] + params["b_hh"]
    for t in range(T):
        gates = obs[t] @ params["w_ih"].T + h @ params["w_hh"].T + b
        i = jax.nn.sigmoid(gates[:, 0 * H:1 * H])
        f = jax.nn.sigmoid(gates[:, 1 * H:2 * H])
        g = jnp.tanh(gates[:, 2 * H:3 * H])
        o = jax.nn.sigmoid(gates[:, 3 * H:4 * H])
        c = f * c + i * g
        h = o * jnp.tanh(c)
    hid = h @ params["w_hid"].T + params["b_hid"]
    hid = jnp.where(hid > 0, hid, jnp.expm1(jnp.minimum(hid, 0.0)))
    mu = hid @ params["w_mu"].T + params["b_mu"]
    std = jnp.exp(params["log_std"])
    z = (act - mu) / std
    logp = (-0.5 * z * z - params["log_std"] - 0.5 * _LOG_2PI).sum(-1)
    return mu, std, logp, h, c


def reference_forward_matched(obs, act, params):
    """Reference using the kernel's exact precision recipe (bf16 MXU operands,
    f32 accumulation & pointwise, explicit sigmoid, exp-1 ELU, inv_std mul)."""
    T, B, obs_dim = obs.shape
    H = params["w_hh"].shape[1]
    bf16 = jnp.bfloat16
    wih_t = params["w_ih"].T.astype(bf16)
    whh_t = params["w_hh"].T.astype(bf16)
    b = (params["b_ih"] + params["b_hh"]).reshape(1, 4 * H)
    xg = jnp.dot(obs.reshape(T * B, obs_dim).astype(bf16), wih_t,
                 preferred_element_type=jnp.float32) + b
    h = jnp.zeros((B, H), jnp.float32)
    c = jnp.zeros((B, H), jnp.float32)
    for t in range(T):
        gates = xg[t * B:(t + 1) * B] + jnp.dot(
            h.astype(bf16), whh_t, preferred_element_type=jnp.float32)
        i = _sigmoid(gates[:, 0 * H:1 * H])
        f = _sigmoid(gates[:, 1 * H:2 * H])
        g = jnp.tanh(gates[:, 2 * H:3 * H])
        o = _sigmoid(gates[:, 3 * H:4 * H])
        c = f * c + i * g
        h = o * jnp.tanh(c)
    hid = jnp.dot(h.astype(bf16), params["w_hid"].T.astype(bf16),
                  preferred_element_type=jnp.float32) + params["b_hid"]
    hid = jnp.where(hid > 0, hid, jnp.exp(jnp.minimum(hid, 0.0)) - 1.0)
    mu = jnp.dot(hid.astype(bf16), params["w_mu"].T.astype(bf16),
                 preferred_element_type=jnp.float32) + params["b_mu"]
    std = jnp.exp(params["log_std"])
    inv_std = jnp.exp(-params["log_std"])
    z = (act - mu) * inv_std
    logp = (-0.5 * z * z - params["log_std"] - 0.5 * _LOG_2PI).sum(-1)
    return mu, std, logp, h, c


# ----------------------------------------------------------------------------
# Main
# ----------------------------------------------------------------------------
if __name__ == "__main__":
    # obs (T, B, obs_dim), act (B, act_dim)
    T, B, OBS_DIM, H, ACT_DIM = 8, 2, 12, 32, 4

    key = jax.random.PRNGKey(0)
    keys = jax.random.split(key, 10)
    bound = 1.0 / np.sqrt(H)

    params = {
        # nn.LSTM(obs_dim, H, num_layers=1)
        "w_ih": jax.random.uniform(keys[0], (4 * H, OBS_DIM), jnp.float32, -bound, bound),
        "w_hh": jax.random.uniform(keys[1], (4 * H, H), jnp.float32, -bound, bound),
        "b_ih": jax.random.uniform(keys[2], (4 * H,), jnp.float32, -bound, bound),
        "b_hh": jax.random.uniform(keys[3], (4 * H,), jnp.float32, -bound, bound),
        # nn.Linear(H, H)
        "w_hid": jax.random.uniform(keys[4], (H, H), jnp.float32, -bound, bound),
        "b_hid": jax.random.uniform(keys[5], (H,), jnp.float32, -bound, bound),
        # nn.Linear(H, act_dim)
        "w_mu": jax.random.uniform(keys[6], (ACT_DIM, H), jnp.float32, -bound, bound),
        "b_mu": jax.random.uniform(keys[7], (ACT_DIM,), jnp.float32, -bound, bound),
        # log_std = -0.5
        "log_std": jnp.full((ACT_DIM,), -0.5, jnp.float32),
    }

    obs = jax.random.normal(keys[8], (T, B, OBS_DIM), jnp.float32)
    act = jax.random.normal(keys[9], (B, ACT_DIM), jnp.float32)

    prepared = prepare_actor_params(params)          # once per parameter update
    fwd = jax.jit(lstm_gaussian_actor)

    mu, std, logp, (hn, cn) = fwd(obs, act, prepared)
    jax.block_until_ready((mu, std, logp, hn, cn))

    # Tight check vs. a reference that uses the same precision recipe.
    mu_m, std_m, logp_m, hn_m, cn_m = reference_forward_matched(obs, act, params)
    np.testing.assert_allclose(np.asarray(mu), np.asarray(mu_m), rtol=2e-3, atol=2e-3)
    np.testing.assert_allclose(np.asarray(std), np.asarray(std_m), rtol=1e-5, atol=1e-5)
    np.testing.assert_allclose(np.asarray(logp), np.asarray(logp_m), rtol=2e-3, atol=2e-3)
    np.testing.assert_allclose(np.asarray(hn), np.asarray(hn_m), rtol=2e-3, atol=2e-3)
    np.testing.assert_allclose(np.asarray(cn), np.asarray(cn_m), rtol=2e-3, atol=2e-3)

    # Looser sanity check vs. full-f32 PyTorch-equivalent math
    # (bf16 MXU inputs introduce ~1e-3-level differences over T steps).
    mu_f, std_f, logp_f, _, _ = reference_forward_f32(obs, act, params)
    np.testing.assert_allclose(np.asarray(mu), np.asarray(mu_f), rtol=5e-2, atol=5e-2)
    np.testing.assert_allclose(np.asarray(logp), np.asarray(logp_f), rtol=5e-2, atol=5e-2)

    print("KERNEL_OK")
</pallas_src>

<mosaic_0001>
module attributes {stable_mosaic.version = 11 : i64} {
  func.func @lstm_actor_kernel(%arg0: memref<64x16xbf16, #tpu.memory_space<vmem>>, %arg1: memref<32x32xf32, #tpu.memory_space<vmem>>, %arg2: memref<112x128xbf16, #tpu.memory_space<vmem>>, %arg3: memref<8x128xf32, #tpu.memory_space<vmem>>, %arg4: memref<8x128xf32, #tpu.memory_space<vmem>>) attributes {dimension_semantics = [], scalar_prefetch = 0 : i64, scratch_operands = 0 : i64, tpu.core_type = #tpu.core_type<tc>} {
    %c0 = arith.constant 0 : index
    %c0_0 = arith.constant 0 : index
    %0 = vector.load %arg2[%c0, %c0_0] : memref<112x128xbf16, #tpu.memory_space<vmem>>, vector<16x128xbf16>
    %c16 = arith.constant 16 : index
    %c0_1 = arith.constant 0 : index
    %1 = vector.load %arg2[%c16, %c0_1] : memref<112x128xbf16, #tpu.memory_space<vmem>>, vector<32x128xbf16>
    %c48 = arith.constant 48 : index
    %c0_2 = arith.constant 0 : index
    %2 = vector.load %arg2[%c48, %c0_2] : memref<112x128xbf16, #tpu.memory_space<vmem>>, vector<32x128xbf16>
    %c80 = arith.constant 80 : index
    %c0_3 = arith.constant 0 : index
    %3 = vector.load %arg2[%c80, %c0_3] : memref<112x128xbf16, #tpu.memory_space<vmem>>, vector<32x128xbf16>
    %c0_4 = arith.constant 0 : index
    %c0_5 = arith.constant 0 : index
    %4 = vector.load %arg3[%c0_4, %c0_5] : memref<8x128xf32, #tpu.memory_space<vmem>>, vector<1x128xf32>
    %c1 = arith.constant 1 : index
    %c0_6 = arith.constant 0 : index
    %5 = vector.load %arg3[%c1, %c0_6] : memref<8x128xf32, #tpu.memory_space<vmem>>, vector<1x128xf32>
    %c2 = arith.constant 2 : index
    %c0_7 = arith.constant 0 : index
    %6 = vector.load %arg3[%c2, %c0_7] : memref<8x128xf32, #tpu.memory_space<vmem>>, vector<1x128xf32>
    %c3 = arith.constant 3 : index
    %c0_8 = arith.constant 0 : index
    %7 = vector.load %arg3[%c3, %c0_8] : memref<8x128xf32, #tpu.memory_space<vmem>>, vector<1x32xf32>
    %c24 = arith.constant 24 : index
    %c0_9 = arith.constant 0 : index
    %8 = vector.load %arg1[%c24, %c0_9] : memref<32x32xf32, #tpu.memory_space<vmem>>, vector<8x32xf32>
    %cst = arith.constant 1.000000e+00 : f32
    %9 = vector.broadcast %cst : f32 to vector<8x32xf32>
    %10 = arith.subf %9, %8 : vector<8x32xf32>
    %c0_10 = arith.constant 0 : index
    %c0_11 = arith.constant 0 : index
    %11 = vector.load %arg1[%c0_10, %c0_11] : memref<32x32xf32, #tpu.memory_space<vmem>>, vector<8x32xf32>
    %12 = arith.mulf %11, %10 : vector<8x32xf32>
    %c8 = arith.constant 8 : index
    %c0_12 = arith.constant 0 : index
    %13 = vector.load %arg1[%c8, %c0_12] : memref<32x32xf32, #tpu.memory_space<vmem>>, vector<8x32xf32>
    %14 = arith.mulf %13, %10 : vector<8x32xf32>
    %c0_13 = arith.constant 0 : index
    %c0_14 = arith.constant 0 : index
    %15 = vector.load %arg0[%c0_13, %c0_14] : memref<64x16xbf16, #tpu.memory_space<vmem>>, vector<64x16xbf16>
    %cst_15 = arith.constant dense<0.000000e+00> : vector<64x128xf32>
    %16 = tpu.matmul %15, %0, %cst_15 {dimension_numbers = #tpu.dot_dimension_numbers<[1], [0], [0], [1], [0, 0, 1, 1], [], []>} : vector<64x16xbf16>, vector<16x128xbf16>, vector<64x128xf32> -> vector<64x128xf32>
    %17 = vector.broadcast %4 : vector<1x128xf32> to vector<64x128xf32>
    %18 = arith.addf %16, %17 : vector<64x128xf32>
    %19 = vector.extract_strided_slice %18 {offsets = [0, 0], sizes = [8, 128], strides = [1, 1]} : vector<64x128xf32> to vector<8x128xf32>
    %20 = arith.truncf %12 : vector<8x32xf32> to vector<8x32xbf16>
    %cst_16 = arith.constant dense<0.000000e+00> : vector<8x128xf32>
    %21 = tpu.matmul %20, %1, %cst_16 {dimension_numbers = #tpu.dot_dimension_numbers<[1], [0], [0], [1], [0, 0, 1, 1], [], []>} : vector<8x32xbf16>, vector<32x128xbf16>, vector<8x128xf32> -> vector<8x128xf32>
    %22 = arith.addf %19, %21 : vector<8x128xf32>
    %cst_17 = arith.constant 0.000000e+00 : f32
    %23 = vector.broadcast %cst_17 : f32 to vector<8x128xf32>
    %24 = arith.subf %23, %22 : vector<8x128xf32>
    %25 = math.exp %24 : vector<8x128xf32>
    %cst_18 = arith.constant 1.000000e+00 : f32
    %26 = vector.broadcast %cst_18 : f32 to vector<8x128xf32>
    %27 = arith.addf %26, %25 : vector<8x128xf32>
    %cst_19 = arith.constant 1.000000e+00 : f32
    %28 = vector.broadcast %cst_19 : f32 to vector<8x128xf32>
    %29 = arith.divf %28, %27 : vector<8x128xf32>
    %30 = vector.extract_strided_slice %29 {offsets = [0, 0], sizes = [8, 32], strides = [1, 1]} : vector<8x128xf32> to vector<8x32xf32>
    %31 = vector.extract_strided_slice %29 {offsets = [0, 32], sizes = [8, 32], strides = [1, 1]} : vector<8x128xf32> to vector<8x32xf32>
    %32 = vector.extract_strided_slice %29 {offsets = [0, 96], sizes = [8, 32], strides = [1, 1]} : vector<8x128xf32> to vector<8x32xf32>
    %33 = vector.extract_strided_slice %22 {offsets = [0, 64], sizes = [8, 32], strides = [1, 1]} : vector<8x128xf32> to vector<8x32xf32>
    %34 = math.tanh %33 : vector<8x32xf32>
    %35 = arith.mulf %31, %14 : vector<8x32xf32>
    %36 = arith.mulf %30, %34 : vector<8x32xf32>
    %37 = arith.addf %35, %36 : vector<8x32xf32>
    %38 = math.tanh %37 : vector<8x32xf32>
    %39 = arith.mulf %32, %38 : vector<8x32xf32>
    %40 = vector.extract_strided_slice %18 {offsets = [8, 0], sizes = [8, 128], strides = [1, 1]} : vector<64x128xf32> to vector<8x128xf32>
    %41 = arith.truncf %39 : vector<8x32xf32> to vector<8x32xbf16>
    %cst_20 = arith.constant dense<0.000000e+00> : vector<8x128xf32>
    %42 = tpu.matmul %41, %1, %cst_20 {dimension_numbers = #tpu.dot_dimension_numbers<[1], [0], [0], [1], [0, 0, 1, 1], [], []>} : vector<8x32xbf16>, vector<32x128xbf16>, vector<8x128xf32> -> vector<8x128xf32>
    %43 = arith.addf %40, %42 : vector<8x128xf32>
    %cst_21 = arith.constant 0.000000e+00 : f32
    %44 = vector.broadcast %cst_21 : f32 to vector<8x128xf32>
    %45 = arith.subf %44, %43 : vector<8x128xf32>
    %46 = math.exp %45 : vector<8x128xf32>
    %cst_22 = arith.constant 1.000000e+00 : f32
    %47 = vector.broadcast %cst_22 : f32 to vector<8x128xf32>
    %48 = arith.addf %47, %46 : vector<8x128xf32>
    %cst_23 = arith.constant 1.000000e+00 : f32
    %49 = vector.broadcast %cst_23 : f32 to vector<8x128xf32>
    %50 = arith.divf %49, %48 : vector<8x128xf32>
    %51 = vector.extract_strided_slice %50 {offsets = [0, 0], sizes = [8, 32], strides = [1, 1]} : vector<8x128xf32> to vector<8x32xf32>
    %52 = vector.extract_strided_slice %50 {offsets = [0, 32], sizes = [8, 32], strides = [1, 1]} : vector<8x128xf32> to vector<8x32xf32>
    %53 = vector.extract_strided_slice %50 {offsets = [0, 96], sizes = [8, 32], strides = [1, 1]} : vector<8x128xf32> to vector<8x32xf32>
    %54 = vector.extract_strided_slice %43 {offsets = [0, 64], sizes = [8, 32], strides = [1, 1]} : vector<8x128xf32> to vector<8x32xf32>
    %55 = math.tanh %54 : vector<8x32xf32>
    %56 = arith.mulf %52, %37 : vector<8x32xf32>
    %57 = arith.mulf %51, %55 : vector<8x32xf32>
    %58 = arith.addf %56, %57 : vector<8x32xf32>
    %59 = math.tanh %58 : vector<8x32xf32>
    %60 = arith.mulf %53, %59 : vector<8x32xf32>
    %61 = vector.extract_strided_slice %18 {offsets = [16, 0], sizes = [8, 128], strides = [1, 1]} : vector<64x128xf32> to vector<8x128xf32>
    %62 = arith.truncf %60 : vector<8x32xf32> to vector<8x32xbf16>
    %cst_24 = arith.constant dense<0.000000e+00> : vector<8x128xf32>
    %63 = tpu.matmul %62, %1, %cst_24 {dimension_numbers = #tpu.dot_dimension_numbers<[1], [0], [0], [1], [0, 0, 1, 1], [], []>} : vector<8x32xbf16>, vector<32x128xbf16>, vector<8x128xf32> -> vector<8x128xf32>
    %64 = arith.addf %61, %63 : vector<8x128xf32>
    %cst_25 = arith.constant 0.000000e+00 : f32
    %65 = vector.broadcast %cst_25 : f32 to vector<8x128xf32>
    %66 = arith.subf %65, %64 : vector<8x128xf32>
    %67 = math.exp %66 : vector<8x128xf32>
    %cst_26 = arith.constant 1.000000e+00 : f32
    %68 = vector.broadcast %cst_26 : f32 to vector<8x128xf32>
    %69 = arith.addf %68, %67 : vector<8x128xf32>
    %cst_27 = arith.constant 1.000000e+00 : f32
    %70 = vector.broadcast %cst_27 : f32 to vector<8x128xf32>
    %71 = arith.divf %70, %69 : vector<8x128xf32>
    %72 = vector.extract_strided_slice %71 {offsets = [0, 0], sizes = [8, 32], strides = [1, 1]} : vector<8x128xf32> to vector<8x32xf32>
    %73 = vector.extract_strided_slice %71 {offsets = [0, 32], sizes = [8, 32], strides = [1, 1]} : vector<8x128xf32> to vector<8x32xf32>
    %74 = vector.extract_strided_slice %71 {offsets = [0, 96], sizes = [8, 32], strides = [1, 1]} : vector<8x128xf32> to vector<8x32xf32>
    %75 = vector.extract_strided_slice %64 {offsets = [0, 64], sizes = [8, 32], strides = [1, 1]} : vector<8x128xf32> to vector<8x32xf32>
    %76 = math.tanh %75 : vector<8x32xf32>
    %77 = arith.mulf %73, %58 : vector<8x32xf32>
    %78 = arith.mulf %72, %76 : vector<8x32xf32>
    %79 = arith.addf %77, %78 : vector<8x32xf32>
    %80 = math.tanh %79 : vector<8x32xf32>
    %81 = arith.mulf %74, %80 : vector<8x32xf32>
    %82 = vector.extract_strided_slice %18 {offsets = [24, 0], sizes = [8, 128], strides = [1, 1]} : vector<64x128xf32> to vector<8x128xf32>
    %83 = arith.truncf %81 : vector<8x32xf32> to vector<8x32xbf16>
    %cst_28 = arith.constant dense<0.000000e+00> : vector<8x128xf32>
    %84 = tpu.matmul %83, %1, %cst_28 {dimension_numbers = #tpu.dot_dimension_numbers<[1], [0], [0], [1], [0, 0, 1, 1], [], []>} : vector<8x32xbf16>, vector<32x128xbf16>, vector<8x128xf32> -> vector<8x128xf32>
    %85 = arith.addf %82, %84 : vector<8x128xf32>
    %cst_29 = arith.constant 0.000000e+00 : f32
    %86 = vector.broadcast %cst_29 : f32 to vector<8x128xf32>
    %87 = arith.subf %86, %85 : vector<8x128xf32>
    %88 = math.exp %87 : vector<8x128xf32>
    %cst_30 = arith.constant 1.000000e+00 : f32
    %89 = vector.broadcast %cst_30 : f32 to vector<8x128xf32>
    %90 = arith.addf %89, %88 : vector<8x128xf32>
    %cst_31 = arith.constant 1.000000e+00 : f32
    %91 = vector.broadcast %cst_31 : f32 to vector<8x128xf32>
    %92 = arith.divf %91, %90 : vector<8x128xf32>
    %93 = vector.extract_strided_slice %92 {offsets = [0, 0], sizes = [8, 32], strides = [1, 1]} : vector<8x128xf32> to vector<8x32xf32>
    %94 = vector.extract_strided_slice %92 {offsets = [0, 32], sizes = [8, 32], strides = [1, 1]} : vector<8x128xf32> to vector<8x32xf32>
    %95 = vector.extract_strided_slice %92 {offsets = [0, 96], sizes = [8, 32], strides = [1, 1]} : vector<8x128xf32> to vector<8x32xf32>
    %96 = vector.extract_strided_slice %85 {offsets = [0, 64], sizes = [8, 32], strides = [1, 1]} : vector<8x128xf32> to vector<8x32xf32>
    %97 = math.tanh %96 : vector<8x32xf32>
    %98 = arith.mulf %94, %79 : vector<8x32xf32>
    %99 = arith.mulf %93, %97 : vector<8x32xf32>
    %100 = arith.addf %98, %99 : vector<8x32xf32>
    %101 = math.tanh %100 : vector<8x32xf32>
    %102 = arith.mulf %95, %101 : vector<8x32xf32>
    %103 = vector.extract_strided_slice %18 {offsets = [32, 0], sizes = [8, 128], strides = [1, 1]} : vector<64x128xf32> to vector<8x128xf32>
    %104 = arith.truncf %102 : vector<8x32xf32> to vector<8x32xbf16>
    %cst_32 = arith.constant dense<0.000000e+00> : vector<8x128xf32>
    %105 = tpu.matmul %104, %1, %cst_32 {dimension_numbers = #tpu.dot_dimension_numbers<[1], [0], [0], [1], [0, 0, 1, 1], [], []>} : vector<8x32xbf16>, vector<32x128xbf16>, vector<8x128xf32> -> vector<8x128xf32>
    %106 = arith.addf %103, %105 : vector<8x128xf32>
    %cst_33 = arith.constant 0.000000e+00 : f32
    %107 = vector.broadcast %cst_33 : f32 to vector<8x128xf32>
    %108 = arith.subf %107, %106 : vector<8x128xf32>
    %109 = math.exp %108 : vector<8x128xf32>
    %cst_34 = arith.constant 1.000000e+00 : f32
    %110 = vector.broadcast %cst_34 : f32 to vector<8x128xf32>
    %111 = arith.addf %110, %109 : vector<8x128xf32>
    %cst_35 = arith.constant 1.000000e+00 : f32
    %112 = vector.broadcast %cst_35 : f32 to vector<8x128xf32>
    %113 = arith.divf %112, %111 : vector<8x128xf32>
    %114 = vector.extract_strided_slice %113 {offsets = [0, 0], sizes = [8, 32], strides = [1, 1]} : vector<8x128xf32> to vector<8x32xf32>
    %115 = vector.extract_strided_slice %113 {offsets = [0, 32], sizes = [8, 32], strides = [1, 1]} : vector<8x128xf32> to vector<8x32xf32>
    %116 = vector.extract_strided_slice %113 {offsets = [0, 96], sizes = [8, 32], strides = [1, 1]} : vector<8x128xf32> to vector<8x32xf32>
    %117 = vector.extract_strided_slice %106 {offsets = [0, 64], sizes = [8, 32], strides = [1, 1]} : vector<8x128xf32> to vector<8x32xf32>
    %118 = math.tanh %117 : vector<8x32xf32>
    %119 = arith.mulf %115, %100 : vector<8x32xf32>
    %120 = arith.mulf %114, %118 : vector<8x32xf32>
    %121 = arith.addf %119, %120 : vector<8x32xf32>
    %122 = math.tanh %121 : vector<8x32xf32>
    %123 = arith.mulf %116, %122 : vector<8x32xf32>
    %124 = vector.extract_strided_slice %18 {offsets = [40, 0], sizes = [8, 128], strides = [1, 1]} : vector<64x128xf32> to vector<8x128xf32>
    %125 = arith.truncf %123 : vector<8x32xf32> to vector<8x32xbf16>
    %cst_36 = arith.constant dense<0.000000e+00> : vector<8x128xf32>
    %126 = tpu.matmul %125, %1, %cst_36 {dimension_numbers = #tpu.dot_dimension_numbers<[1], [0], [0], [1], [0, 0, 1, 1], [], []>} : vector<8x32xbf16>, vector<32x128xbf16>, vector<8x128xf32> -> vector<8x128xf32>
    %127 = arith.addf %124, %126 : vector<8x128xf32>
    %cst_37 = arith.constant 0.000000e+00 : f32
    %128 = vector.broadcast %cst_37 : f32 to vector<8x128xf32>
    %129 = arith.subf %128, %127 : vector<8x128xf32>
    %130 = math.exp %129 : vector<8x128xf32>
    %cst_38 = arith.constant 1.000000e+00 : f32
    %131 = vector.broadcast %cst_38 : f32 to vector<8x128xf32>
    %132 = arith.addf %131, %130 : vector<8x128xf32>
    %cst_39 = arith.constant 1.000000e+00 : f32
    %133 = vector.broadcast %cst_39 : f32 to vector<8x128xf32>
    %134 = arith.divf %133, %132 : vector<8x128xf32>
    %135 = vector.extract_strided_slice %134 {offsets = [0, 0], sizes = [8, 32], strides = [1, 1]} : vector<8x128xf32> to vector<8x32xf32>
    %136 = vector.extract_strided_slice %134 {offsets = [0, 32], sizes = [8, 32], strides = [1, 1]} : vector<8x128xf32> to vector<8x32xf32>
    %137 = vector.extract_strided_slice %134 {offsets = [0, 96], sizes = [8, 32], strides = [1, 1]} : vector<8x128xf32> to vector<8x32xf32>
    %138 = vector.extract_strided_slice %127 {offsets = [0, 64], sizes = [8, 32], strides = [1, 1]} : vector<8x128xf32> to vector<8x32xf32>
    %139 = math.tanh %138 : vector<8x32xf32>
    %140 = arith.mulf %136, %121 : vector<8x32xf32>
    %141 = arith.mulf %135, %139 : vector<8x32xf32>
    %142 = arith.addf %140, %141 : vector<8x32xf32>
    %143 = math.tanh %142 : vector<8x32xf32>
    %144 = arith.mulf %137, %143 : vector<8x32xf32>
    %145 = vector.extract_strided_slice %18 {offsets = [48, 0], sizes = [8, 128], strides = [1, 1]} : vector<64x128xf32> to vector<8x128xf32>
    %146 = arith.truncf %144 : vector<8x32xf32> to vector<8x32xbf16>
    %cst_40 = arith.constant dense<0.000000e+00> : vector<8x128xf32>
    %147 = tpu.matmul %146, %1, %cst_40 {dimension_numbers = #tpu.dot_dimension_numbers<[1], [0], [0], [1], [0, 0, 1, 1], [], []>} : vector<8x32xbf16>, vector<32x128xbf16>, vector<8x128xf32> -> vector<8x128xf32>
    %148 = arith.addf %145, %147 : vector<8x128xf32>
    %cst_41 = arith.constant 0.000000e+00 : f32
    %149 = vector.broadcast %cst_41 : f32 to vector<8x128xf32>
    %150 = arith.subf %149, %148 : vector<8x128xf32>
    %151 = math.exp %150 : vector<8x128xf32>
    %cst_42 = arith.constant 1.000000e+00 : f32
    %152 = vector.broadcast %cst_42 : f32 to vector<8x128xf32>
    %153 = arith.addf %152, %151 : vector<8x128xf32>
    %cst_43 = arith.constant 1.000000e+00 : f32
    %154 = vector.broadcast %cst_43 : f32 to vector<8x128xf32>
    %155 = arith.divf %154, %153 : vector<8x128xf32>
    %156 = vector.extract_strided_slice %155 {offsets = [0, 0], sizes = [8, 32], strides = [1, 1]} : vector<8x128xf32> to vector<8x32xf32>
    %157 = vector.extract_strided_slice %155 {offsets = [0, 32], sizes = [8, 32], strides = [1, 1]} : vector<8x128xf32> to vector<8x32xf32>
    %158 = vector.extract_strided_slice %155 {offsets = [0, 96], sizes = [8, 32], strides = [1, 1]} : vector<8x128xf32> to vector<8x32xf32>
    %159 = vector.extract_strided_slice %148 {offsets = [0, 64], sizes = [8, 32], strides = [1, 1]} : vector<8x128xf32> to vector<8x32xf32>
    %160 = math.tanh %159 : vector<8x32xf32>
    %161 = arith.mulf %157, %142 : vector<8x32xf32>
    %162 = arith.mulf %156, %160 : vector<8x32xf32>
    %163 = arith.addf %161, %162 : vector<8x32xf32>
    %164 = math.tanh %163 : vector<8x32xf32>
    %165 = arith.mulf %158, %164 : vector<8x32xf32>
    %166 = vector.extract_strided_slice %18 {offsets = [56, 0], sizes = [8, 128], strides = [1, 1]} : vector<64x128xf32> to vector<8x128xf32>
    %167 = arith.truncf %165 : vector<8x32xf32> to vector<8x32xbf16>
    %cst_44 = arith.constant dense<0.000000e+00> : vector<8x128xf32>
    %168 = tpu.matmul %167, %1, %cst_44 {dimension_numbers = #tpu.dot_dimension_numbers<[1], [0], [0], [1], [0, 0, 1, 1], [], []>} : vector<8x32xbf16>, vector<32x128xbf16>, vector<8x128xf32> -> vector<8x128xf32>
    %169 = arith.addf %166, %168 : vector<8x128xf32>
    %cst_45 = arith.constant 0.000000e+00 : f32
    %170 = vector.broadcast %cst_45 : f32 to vector<8x128xf32>
    %171 = arith.subf %170, %169 : vector<8x128xf32>
    %172 = math.exp %171 : vector<8x128xf32>
    %cst_46 = arith.constant 1.000000e+00 : f32
    %173 = vector.broadcast %cst_46 : f32 to vector<8x128xf32>
    %174 = arith.addf %173, %172 : vector<8x128xf32>
    %cst_47 = arith.constant 1.000000e+00 : f32
    %175 = vector.broadcast %cst_47 : f32 to vector<8x128xf32>
    %176 = arith.divf %175, %174 : vector<8x128xf32>
    %177 = vector.extract_strided_slice %176 {offsets = [0, 0], sizes = [8, 32], strides = [1, 1]} : vector<8x128xf32> to vector<8x32xf32>
    %178 = vector.extract_strided_slice %176 {offsets = [0, 32], sizes = [8, 32], strides = [1, 1]} : vector<8x128xf32> to vector<8x32xf32>
    %179 = vector.extract_strided_slice %176 {offsets = [0, 96], sizes = [8, 32], strides = [1, 1]} : vector<8x128xf32> to vector<8x32xf32>
    %180 = vector.extract_strided_slice %169 {offsets = [0, 64], sizes = [8, 32], strides = [1, 1]} : vector<8x128xf32> to vector<8x32xf32>
    %181 = math.tanh %180 : vector<8x32xf32>
    %182 = arith.mulf %178, %163 : vector<8x32xf32>
    %183 = arith.mulf %177, %181 : vector<8x32xf32>
    %184 = arith.addf %182, %183 : vector<8x32xf32>
    %185 = math.tanh %184 : vector<8x32xf32>
    %186 = arith.mulf %179, %185 : vector<8x32xf32>
    %187 = arith.truncf %186 : vector<8x32xf32> to vector<8x32xbf16>
    %cst_48 = arith.constant dense<0.000000e+00> : vector<8x128xf32>
    %188 = tpu.matmul %187, %2, %cst_48 {dimension_numbers = #tpu.dot_dimension_numbers<[1], [0], [0], [1], [0, 0, 1, 1], [], []>} : vector<8x32xbf16>, vector<32x128xbf16>, vector<8x128xf32> -> vector<8x128xf32>
    %189 = vector.broadcast %5 : vector<1x128xf32> to vector<8x128xf32>
    %190 = arith.addf %188, %189 : vector<8x128xf32>
    %cst_49 = arith.constant 0.000000e+00 : f32
    %191 = vector.broadcast %cst_49 : f32 to vector<8x128xf32>
    %192 = arith.cmpf ogt, %190, %191 : vector<8x128xf32>
    %cst_50 = arith.constant 0.000000e+00 : f32
    %193 = vector.broadcast %cst_50 : f32 to vector<8x128xf32>
    %194 = arith.minimumf %190, %193 : vector<8x128xf32>
    %195 = math.exp %194 : vector<8x128xf32>
    %cst_51 = arith.constant 1.000000e+00 : f32
    %196 = vector.broadcast %cst_51 : f32 to vector<8x128xf32>
    %197 = arith.subf %195, %196 : vector<8x128xf32>
    %198 = arith.select %192, %190, %197 : vector<8x128xi1>, vector<8x128xf32>
    %199 = vector.extract_strided_slice %198 {offsets = [0, 0], sizes = [8, 32], strides = [1, 1]} : vector<8x128xf32> to vector<8x32xf32>
    %200 = arith.truncf %199 : vector<8x32xf32> to vector<8x32xbf16>
    %cst_52 = arith.constant dense<0.000000e+00> : vector<8x128xf32>
    %201 = tpu.matmul %200, %3, %cst_52 {dimension_numbers = #tpu.dot_dimension_numbers<[1], [0], [0], [1], [0, 0, 1, 1], [], []>} : vector<8x32xbf16>, vector<32x128xbf16>, vector<8x128xf32> -> vector<8x128xf32>
    %202 = vector.broadcast %6 : vector<1x128xf32> to vector<8x128xf32>
    %203 = arith.addf %201, %202 : vector<8x128xf32>
    %c16_53 = arith.constant 16 : index
    %c0_54 = arith.constant 0 : index
    %204 = vector.load %arg1[%c16_53, %c0_54] : memref<32x32xf32, #tpu.memory_space<vmem>>, vector<8x32xf32>
    %cst_55 = arith.constant 0.000000e+00 : f32
    %205 = vector.broadcast %cst_55 : f32 to vector<1x32xf32>
    %206 = arith.subf %205, %7 : vector<1x32xf32>
    %207 = math.exp %206 : vector<1x32xf32>
    %208 = vector.extract_strided_slice %203 {offsets = [0, 0], sizes = [8, 32], strides = [1, 1]} : vector<8x128xf32> to vector<8x32xf32>
    %209 = arith.subf %204, %208 : vector<8x32xf32>
    %210 = vector.broadcast %207 : vector<1x32xf32> to vector<8x32xf32>
    %211 = arith.mulf %209, %210 : vector<8x32xf32>
    %cst_56 = arith.constant -5.000000e-01 : f32
    %212 = vector.broadcast %cst_56 : f32 to vector<8x32xf32>
    %213 = arith.mulf %212, %211 : vector<8x32xf32>
    %214 = arith.mulf %213, %211 : vector<8x32xf32>
    %215 = vector.broadcast %7 : vector<1x32xf32> to vector<8x32xf32>
    %216 = arith.subf %214, %215 : vector<8x32xf32>
    %cst_57 = arith.constant 0.918938517 : f32
    %217 = vector.broadcast %cst_57 : f32 to vector<8x32xf32>
    %218 = arith.subf %216, %217 : vector<8x32xf32>
    %219 = tpu.iota {dimensions = array<i32: 1>} : vector<8x32xi32>
    %c4_i32 = arith.constant 4 : i32
    %220 = vector.broadcast %c4_i32 : i32 to vector<8x32xi32>
    %221 = arith.cmpi slt, %219, %220 : vector<8x32xi32>
    %cst_58 = arith.constant 0.000000e+00 : f32
    %222 = vector.broadcast %cst_58 : f32 to vector<8x32xf32>
    %223 = arith.select %221, %218, %222 : vector<8x32xi1>, vector<8x32xf32>
    %cst_59 = arith.constant dense<0.000000e+00> : vector<8xf32>
    %224 = vector.multi_reduction <add>, %223, %cst_59 [1] : vector<8x32xf32> to vector<8xf32>
    %225 = vector.shape_cast %224 : vector<8xf32> to vector<8x1xf32>
    %226 = tpu.iota {dimensions = array<i32: 1>} : vector<8x64xi32>
    %c4_i32_60 = arith.constant 4 : i32
    %227 = vector.broadcast %c4_i32_60 : i32 to vector<8x64xi32>
    %228 = arith.cmpi eq, %226, %227 : vector<8x64xi32>
    %229 = vector.extract_strided_slice %203 {offsets = [0, 0], sizes = [8, 64], strides = [1, 1]} : vector<8x128xf32> to vector<8x64xf32>
    %230 = vector.shape_cast %225 : vector<8x1xf32> to vector<8x1xf32>
    %231 = vector.broadcast %230 : vector<8x1xf32> to vector<8x64xf32>
    %232 = arith.select %228, %231, %229 : vector<8x64xi1>, vector<8x64xf32>
    %c0_61 = arith.constant 0 : index
    %c0_62 = arith.constant 0 : index
    %233 = vector.load %arg4[%c0_61, %c0_62] : memref<8x128xf32, #tpu.memory_space<vmem>>, vector<8x32xf32>
    tpu.vector_store %arg4[%c0_61, %c0_62], %186 {strides = array<i32>} : memref<8x128xf32, #tpu.memory_space<vmem>>, vector<8x32xf32>,
    %c0_63 = arith.constant 0 : index
    %c32 = arith.constant 32 : index
    %234 = vector.load %arg4[%c0_63, %c32] : memref<8x128xf32, #tpu.memory_space<vmem>>, vector<8x32xf32>
    tpu.vector_store %arg4[%c0_63, %c32], %184 {strides = array<i32>} : memref<8x128xf32, #tpu.memory_space<vmem>>, vector<8x32xf32>,
    %c0_64 = arith.constant 0 : index
    %c64 = arith.constant 64 : index
    %235 = vector.load %arg4[%c0_64, %c64] : memref<8x128xf32, #tpu.memory_space<vmem>>, vector<8x64xf32>
    tpu.vector_store %arg4[%c0_64, %c64], %232 {strides = array<i32>} : memref<8x128xf32, #tpu.memory_space<vmem>>, vector<8x64xf32>,
    return
  }
}

</mosaic_0001>

<llo_original>
// kernel: lstm_gaussian_actor.1
$region0: #{lstm_gaussian_actor.1}
  #allocation0 [shape = 'u32[]', space=smem, size = 0x4, offset = 0x4, fixed_abs, tag = 'smem constant byte address 0x4 - core index']
  #allocation1 [shape = 'u32[144,128]{1,0:T(1,128)}', space=vmem, size = 0x12000, scoped, tag = 'internal scratch']
  %s0 = inlined_call_operand.vmem [shape: bf16[64,16], index: 0, kind: input, shape index: {}]
  %s1 = inlined_call_operand.vmem [shape: f32[32,32], index: 1, kind: input, shape index: {}]
  %s2 = inlined_call_operand.vmem [shape: bf16[112,128], index: 2, kind: input, shape index: {}]
  %s3 = inlined_call_operand.vmem [shape: f32[8,128], index: 3, kind: input, shape index: {}]
  %s4 = inlined_call_operand.vmem [shape: f32[8,128], index: 4, kind: output, shape index: {}]
  %s5 = sld [smem:[#allocation0]]
  $region26: #{lstm_gaussian_actor.1} parent=0
    _
  %s7 = ssub.s32 1, %s5
  %s8 = scalar_select 0, %s7, %s5
  // Predicated region
  $region2: #{lstm_gaussian_actor.1} parent=0 // pred_check
    _
  $region3: #{lstm_gaussian_actor.1} parent=0 // pred_check_branch
    %10 = sbr.rel (0) target = $region5
  $region4: #{lstm_gaussian_actor.1} parent=0 // pred_region
    _
  $region5: #{lstm_gaussian_actor.1} parent=0 // pred_fallthru
    _
  // Predicated region
  $region6: #{lstm_gaussian_actor.1} parent=0 // pred_check
    _
  $region7: #{lstm_gaussian_actor.1} parent=0 // pred_check_branch
    %12 = sbr.rel (0) target = $region9
  $region8: #{lstm_gaussian_actor.1} parent=0 // pred_region
    _
  $region9: #{lstm_gaussian_actor.1} parent=0 // pred_fallthru
    _
  // Predicated region
  $region10: #{lstm_gaussian_actor.1} parent=0 // pred_check
    _
  $region11: #{lstm_gaussian_actor.1} parent=0 // pred_check_branch
    %14 = sbr.rel (0) target = $region13
  $region12: #{lstm_gaussian_actor.1} parent=0 // pred_region
    _
  $region13: #{lstm_gaussian_actor.1} parent=0 // pred_fallthru
    _
  // Predicated region
  $region14: #{lstm_gaussian_actor.1} parent=0 // pred_check
    _
  $region15: #{lstm_gaussian_actor.1} parent=0 // pred_check_branch
    %16 = sbr.rel (0) target = $region17
  $region16: #{lstm_gaussian_actor.1} parent=0 // pred_region
    _
  $region17: #{lstm_gaussian_actor.1} parent=0 // pred_fallthru
    _
  %v18 = vld [vmem:[%s2] sm:$0xf]
  %v19 = vld [vmem:[%s2 + $0x4] sm:$0xf]
  %v20 = vld [vmem:[%s2 + $0x8] sm:$0xf]
  %v21 = vld [vmem:[%s2 + $0xc] sm:$0xf]
  %v22 = vld [vmem:[%s2 + $0x10] sm:$0xf]
  %v23 = vld [vmem:[%s2 + $0x14] sm:$0xf]
  %v24 = vld [vmem:[%s2 + $0x18] sm:$0xf]
  %v25 = vld [vmem:[%s2 + $0x1c] sm:$0xf]
  %v26 = vld [vmem:[%s2 + $0x20] sm:$0xf]
  %v27 = vld [vmem:[%s2 + $0x24] sm:$0xf]
  %v28 = vld [vmem:[%s2 + $0x28] sm:$0xf]
  %v29 = vld [vmem:[%s2 + $0x2c] sm:$0xf]
  %v30 = vld [vmem:[%s2 + $0x30] sm:$0xf]
  %v31 = vld [vmem:[%s2 + $0x34] sm:$0xf]
  %v32 = vld [vmem:[%s3] sm:$0x1]
  %v33 = vld [vmem:[%s3 + $0x1] sm:$0x1]
  %v34 = vld [vmem:[%s3 + $0x2] sm:$0x1]
  %v35 = vld [vmem:[%s3 + $0x3] sm:$0x1]
  %v36 = vld [vmem:[%s1 + $0x18] sm:$0xff]
  %v37 = vsub.f32 1.0, %v36
  %v38 = vld [vmem:[%s1] sm:$0xff]
  %v39 = vmul.f32 %v38, %v37
  %v40 = vld [vmem:[%s1 + $0x8] sm:$0xff]
  %v41 = vmul.f32 %v40, %v37
  %v42 = vld [vmem:[%s0] sm:$0xf]
  %v43 = vld [vmem:[%s0 + $0x4] sm:$0xf]
  %v44 = vld [vmem:[%s0 + $0x8] sm:$0xf]
  %v45 = vld [vmem:[%s0 + $0xc] sm:$0xf]
  %v46 = vld [vmem:[%s0 + $0x10] sm:$0xf]
  %v47 = vld [vmem:[%s0 + $0x14] sm:$0xf]
  %v48 = vld [vmem:[%s0 + $0x18] sm:$0xf]
  %v49 = vld [vmem:[%s0 + $0x1c] sm:$0xf]
  %v50 = vlaneseq
  %v51 = vshrl.u32 %v50, 7
  %v52 = vsub.s32 0, %v51
  %v53 = vrot.slane %v32, %v52
  %v62 = vunpack.c.l.b16 %v42
  %v63 = vunpack.c.l.b16 %v43
  %v64 = vunpack.c.l.b16 %v44
  %v65 = vunpack.c.l.b16 %v45
  %v66 = vunpack.c.l.b16 %v46
  %v67 = vunpack.c.l.b16 %v47
  %v68 = vunpack.c.l.b16 %v48
  %v69 = vunpack.c.l.b16 %v49
  %v70 = vpack.c.b16 %v63, %v62
  %v71 = vpack.c.b16 %v65, %v64
  %v72 = vpack.c.b16 %v67, %v66
  %v73 = vpack.c.b16 %v69, %v68
  %v76 = vunpack.c.l.b16 %v18
  %v77 = vunpack.c.l.b16 %v19
  %v78 = vpack.c.b16 %v77, %v76
  %vm80 = vcmask 130048
  %v82 = vsel %vm80, %v70, 0
  %v85 = vsel %vm80, %v71, 0
  %v88 = vsel %vm80, %v72, 0
  %v91 = vsel %vm80, %v73, 0
  %93 = vmatprep.subr.bf16.mxu0 0
  %94 = vmatpush1.bf16.msra.mxu0 %v78
  %95 = vmatprep.subr.bf16.mxu0 0
  %96 = vmatpush1.bf16.msra.mxu0 0
  %97 = vmatprep.subr.bf16.mxu0 0
  %98 = vmatpush1.bf16.msra.mxu0 0
  %99 = vmatprep.subr.bf16.mxu0 0
  %100 = vmatpush1.bf16.msra.mxu0 0
  %101 = vmatprep.subr.bf16.mxu0 0
  %102 = vmatpush1.bf16.msra.mxu0 0
  %103 = vmatprep.subr.bf16.mxu0 0
  %104 = vmatpush1.bf16.msra.mxu0 0
  %105 = vmatprep.subr.bf16.mxu0 0
  %106 = vmatpush1.bf16.msra.mxu0 0
  %107 = vmatprep.subr.bf16.mxu0 0
  %108 = vmatpush1.bf16.msra.mxu0 0
  %109 = vmatprep.subr.bf16.mxu0 0
  %110 = vmatpush1.bf16.msra.mxu0 0
  %111 = vmatprep.subr.bf16.mxu0 0
  %112 = vmatpush1.bf16.msra.mxu0 0
  %113 = vmatprep.subr.bf16.mxu0 0
  %114 = vmatpush1.bf16.msra.mxu0 0
  %115 = vmatprep.subr.bf16.mxu0 0
  %116 = vmatpush1.bf16.msra.mxu0 0
  %117 = vmatprep.subr.bf16.mxu0 0
  %118 = vmatpush1.bf16.msra.mxu0 0
  %119 = vmatprep.subr.bf16.mxu0 0
  %120 = vmatpush1.bf16.msra.mxu0 0
  %121 = vmatprep.subr.bf16.mxu0 0
  %122 = vmatpush1.bf16.msra.mxu0 0
  %123 = vmatprep.subr.bf16.mxu0 0
  %124 = vmatpush1.bf16.msra.mxu0 0
  %125 = vmatprep.mubr.bf16.mxu0 0
  %126 = vmatmul.mubr.bf16.gmra.mrb[0].mxu0 %v82
  %v127 = vpop.f32.mrb[0].mxu0
  %v128 = vadd.f32 %v53, %v127
  %v129 = vpop.f32.mrb[0].mxu0
  %v130 = vpop.f32.mrb[0].mxu0
  %v131 = vadd.f32 %v53, %v130
  %v132 = vpop.f32.mrb[0].mxu0
  %133 = vmatprep.mubr.bf16.mxu0 0
  %134 = vmatmul.mubr.bf16.gmra.mrb[0].mxu0 %v85
  %v135 = vpop.f32.mrb[0].mxu0
  %v136 = vadd.f32 %v53, %v135
  %v137 = vpop.f32.mrb[0].mxu0
  %v138 = vpop.f32.mrb[0].mxu0
  %v139 = vadd.f32 %v53, %v138
  %v140 = vpop.f32.mrb[0].mxu0
  %141 = vmatprep.mubr.bf16.mxu0 0
  %142 = vmatmul.mubr.bf16.gmra.mrb[0].mxu0 %v88
  %v143 = vpop.f32.mrb[0].mxu0
  %v144 = vadd.f32 %v53, %v143
  %v145 = vpop.f32.mrb[0].mxu0
  %v146 = vpop.f32.mrb[0].mxu0
  %v147 = vadd.f32 %v53, %v146
  %v148 = vpop.f32.mrb[0].mxu0
  %149 = vmatprep.mubr.bf16.mxu0 0
  %150 = vmatmul.mubr.bf16.gmra.mrb[0].mxu0 %v91
  %v151 = vpop.f32.mrb[0].mxu0
  %v152 = vadd.f32 %v53, %v151
  %v153 = vpop.f32.mrb[0].mxu0
  %v154 = vpop.f32.mrb[0].mxu0
  %v155 = vadd.f32 %v53, %v154
  %v156 = vpop.f32.mrb[0].mxu0
  %157 = vdwg.mxu0
  %v158 = vpack.c.bf16 %v39, %v39
  %v163 = vunpack.c.l.b16 %v20
  %v164 = vunpack.c.l.b16 %v21
  %v165 = vunpack.c.l.b16 %v22
  %v166 = vunpack.c.l.b16 %v23
  %v167 = vpack.c.b16 %v164, %v163
  %v168 = vpack.c.b16 %v166, %v165
  %vm171 = vcmask 261120
  %v173 = vsel %vm171, %v158, 0
  %175 = vmatprep.subr.bf16.mxu0 0
  %176 = vmatpush1.bf16.msra.mxu0 %v167
  %177 = vmatprep.subr.bf16.mxu0 0
  %178 = vmatpush1.bf16.msra.mxu0 %v168
  %179 = vmatprep.subr.bf16.mxu0 0
  %180 = vmatpush1.bf16.msra.mxu0 0
  %181 = vmatprep.subr.bf16.mxu0 0
  %182 = vmatpush1.bf16.msra.mxu0 0
  %183 = vmatprep.subr.bf16.mxu0 0
  %184 = vmatpush1.bf16.msra.mxu0 0
  %185 = vmatprep.subr.bf16.mxu0 0
  %186 = vmatpush1.bf16.msra.mxu0 0
  %187 = vmatprep.subr.bf16.mxu0 0
  %188 = vmatpush1.bf16.msra.mxu0 0
  %189 = vmatprep.subr.bf16.mxu0 0
  %190 = vmatpush1.bf16.msra.mxu0 0
  %191 = vmatprep.subr.bf16.mxu0 0
  %192 = vmatpush1.bf16.msra.mxu0 0
  %193 = vmatprep.subr.bf16.mxu0 0
  %194 = vmatpush1.bf16.msra.mxu0 0
  %195 = vmatprep.subr.bf16.mxu0 0
  %196 = vmatpush1.bf16.msra.mxu0 0
  %197 = vmatprep.subr.bf16.mxu0 0
  %198 = vmatpush1.bf16.msra.mxu0 0
  %199 = vmatprep.subr.bf16.mxu0 0
  %200 = vmatpush1.bf16.msra.mxu0 0
  %201 = vmatprep.subr.bf16.mxu0 0
  %202 = vmatpush1.bf16.msra.mxu0 0
  %203 = vmatprep.subr.bf16.mxu0 0
  %204 = vmatpush1.bf16.msra.mxu0 0
  %205 = vmatprep.subr.bf16.mxu0 0
  %206 = vmatpush1.bf16.msra.mxu0 0
  %207 = vmatprep.mubr.bf16.mxu0 0
  %208 = vmatmul.mubr.bf16.gmra.mrb[0].mxu0 %v173
  %v209 = vpop.f32.mrb[0].mxu0
  %v210 = vadd.f32 0.0, %v209
  %v211 = vpop.f32.mrb[0].mxu0
  %v212 = vpop.f32.mrb[0].mxu0
  %v213 = vpop.f32.mrb[0].mxu0
  %214 = vdwg.mxu0
  %v215 = vadd.f32 %v128, %v210
  %v216 = vsub.f32 0.0, %v215
  %v217 = vmul.f32 %v216, 1.442695
  %v218 = vpow.pop %v217
  %v219 = vadd.f32 %v218, 1.0
  %v220 = vrcp.pop %v219
  %v221 = vmul.f32 1.0, %v220
  %v222 = vtanh.pop %v215
  %224 = vrot.lane.b32.xlu0 %v41, 32
  %v225 = vpop.permute.xlu0 %224
  %v227 = vmul.f32 %v221, %v225
  %229 = vrot.lane.b32.xlu0 %v222, 64
  %v230 = vpop.permute.xlu0 %229
  %v232 = vmul.f32 %v221, %v230
  %234 = vrot.lane.b32.xlu0 %v232, 32
  %v235 = vpop.permute.xlu0 %234
  %v237 = vadd.f32 %v227, %v235
  %v238 = vtanh.pop %v237
  %240 = vrot.lane.b32.xlu0 %v238, 64
  %v241 = vpop.permute.xlu0 %240
  %v243 = vmul.f32 %v221, %v241
  %v244 = vpack.c.bf16 %v243, %v243
  %246 = vrot.lane.b32.xlu0 %v244, 32
  %v247 = vpop.permute.xlu0 %246
  %v249 = vsel %vm171, %v247, 0
  %251 = vmatprep.subr.bf16.mxu0 0
  %252 = vmatpush1.bf16.msra.mxu0 %v167
  %253 = vmatprep.subr.bf16.mxu0 0
  %254 = vmatpush1.bf16.msra.mxu0 %v168
  %255 = vmatprep.subr.bf16.mxu0 0
  %256 = vmatpush1.bf16.msra.mxu0 0
  %257 = vmatprep.subr.bf16.mxu0 0
  %258 = vmatpush1.bf16.msra.mxu0 0
  %259 = vmatprep.subr.bf16.mxu0 0
  %260 = vmatpush1.bf16.msra.mxu0 0
  %261 = vmatprep.subr.bf16.mxu0 0
  %262 = vmatpush1.bf16.msra.mxu0 0
  %263 = vmatprep.subr.bf16.mxu0 0
  %264 = vmatpush1.bf16.msra.mxu0 0
  %265 = vmatprep.subr.bf16.mxu0 0
  %266 = vmatpush1.bf16.msra.mxu0 0
  %267 = vmatprep.subr.bf16.mxu0 0
  %268 = vmatpush1.bf16.msra.mxu0 0
  %269 = vmatprep.subr.bf16.mxu0 0
  %270 = vmatpush1.bf16.msra.mxu0 0
  %271 = vmatprep.subr.bf16.mxu0 0
  %272 = vmatpush1.bf16.msra.mxu0 0
  %273 = vmatprep.subr.bf16.mxu0 0
  %274 = vmatpush1.bf16.msra.mxu0 0
  %275 = vmatprep.subr.bf16.mxu0 0
  %276 = vmatpush1.bf16.msra.mxu0 0
  %277 = vmatprep.subr.bf16.mxu0 0
  %278 = vmatpush1.bf16.msra.mxu0 0
  %279 = vmatprep.subr.bf16.mxu0 0
  %280 = vmatpush1.bf16.msra.mxu0 0
  %281 = vmatprep.subr.bf16.mxu0 0
  %282 = vmatpush1.bf16.msra.mxu0 0
  %283 = vmatprep.mubr.bf16.mxu0 0
  %284 = vmatmul.mubr.bf16.gmra.mrb[0].mxu0 %v249
  %v285 = vpop.f32.mrb[0].mxu0
  %v286 = vadd.f32 0.0, %v285
  %v287 = vpop.f32.mrb[0].mxu0
  %v288 = vpop.f32.mrb[0].mxu0
  %v289 = vpop.f32.mrb[0].mxu0
  %290 = vdwg.mxu0
  %v291 = vadd.f32 %v131, %v286
  %v292 = vsub.f32 0.0, %v291
  %v293 = vmul.f32 %v292, 1.442695
  %v294 = vpow.pop %v293
  %v295 = vadd.f32 %v294, 1.0
  %v296 = vrcp.pop %v295
  %v297 = vmul.f32 1.0, %v296
  %v298 = vtanh.pop %v291
  %v299 = vmul.f32 %v297, %v237
  %301 = vrot.lane.b32.xlu0 %v298, 64
  %v302 = vpop.permute.xlu0 %301
  %v304 = vmul.f32 %v297, %v302
  %306 = vrot.lane.b32.xlu0 %v304, 32
  %v307 = vpop.permute.xlu0 %306
  %v309 = vadd.f32 %v299, %v307
  %v310 = vtanh.pop %v309
  %312 = vrot.lane.b32.xlu0 %v310, 64
  %v313 = vpop.permute.xlu0 %312
  %v315 = vmul.f32 %v297, %v313
  %v316 = vpack.c.bf16 %v315, %v315
  %318 = vrot.lane.b32.xlu0 %v316, 32
  %v319 = vpop.permute.xlu0 %318
  %v321 = vsel %vm171, %v319, 0
  %323 = vmatprep.subr.bf16.mxu0 0
  %324 = vmatpush1.bf16.msra.mxu0 %v167
  %325 = vmatprep.subr.bf16.mxu0 0
  %326 = vmatpush1.bf16.msra.mxu0 %v168
  %327 = vmatprep.subr.bf16.mxu0 0
  %328 = vmatpush1.bf16.msra.mxu0 0
  %329 = vmatprep.subr.bf16.mxu0 0
  %330 = vmatpush1.bf16.msra.mxu0 0
  %331 = vmatprep.subr.bf16.mxu0 0
  %332 = vmatpush1.bf16.msra.mxu0 0
  %333 = vmatprep.subr.bf16.mxu0 0
  %334 = vmatpush1.bf16.msra.mxu0 0
  %335 = vmatprep.subr.bf16.mxu0 0
  %336 = vmatpush1.bf16.msra.mxu0 0
  %337 = vmatprep.subr.bf16.mxu0 0
  %338 = vmatpush1.bf16.msra.mxu0 0
  %339 = vmatprep.subr.bf16.mxu0 0
  %340 = vmatpush1.bf16.msra.mxu0 0
  %341 = vmatprep.subr.bf16.mxu0 0
  %342 = vmatpush1.bf16.msra.mxu0 0
  %343 = vmatprep.subr.bf16.mxu0 0
  %344 = vmatpush1.bf16.msra.mxu0 0
  %345 = vmatprep.subr.bf16.mxu0 0
  %346 = vmatpush1.bf16.msra.mxu0 0
  %347 = vmatprep.subr.bf16.mxu0 0
  %348 = vmatpush1.bf16.msra.mxu0 0
  %349 = vmatprep.subr.bf16.mxu0 0
  %350 = vmatpush1.bf16.msra.mxu0 0
  %351 = vmatprep.subr.bf16.mxu0 0
  %352 = vmatpush1.bf16.msra.mxu0 0
  %353 = vmatprep.subr.bf16.mxu0 0
  %354 = vmatpush1.bf16.msra.mxu0 0
  %355 = vmatprep.mubr.bf16.mxu0 0
  %356 = vmatmul.mubr.bf16.gmra.mrb[0].mxu0 %v321
  %v357 = vpop.f32.mrb[0].mxu0
  %v358 = vadd.f32 0.0, %v357
  %v359 = vpop.f32.mrb[0].mxu0
  %v360 = vpop.f32.mrb[0].mxu0
  %v361 = vpop.f32.mrb[0].mxu0
  %362 = vdwg.mxu0
  %v363 = vadd.f32 %v136, %v358
  %v364 = vsub.f32 0.0, %v363
  %v365 = vmul.f32 %v364, 1.442695
  %v366 = vpow.pop %v365
  %v367 = vadd.f32 %v366, 1.0
  %v368 = vrcp.pop %v367
  %v369 = vmul.f32 1.0, %v368
  %v370 = vtanh.pop %v363
  %v371 = vmul.f32 %v369, %v309
  %373 = vrot.lane.b32.xlu0 %v370, 64
  %v374 = vpop.permute.xlu0 %373
  %v376 = vmul.f32 %v369, %v374
  %378 = vrot.lane.b32.xlu0 %v376, 32
  %v379 = vpop.permute.xlu0 %378
  %v381 = vadd.f32 %v371, %v379
  %v382 = vtanh.pop %v381
  %384 = vrot.lane.b32.xlu0 %v382, 64
  %v385 = vpop.permute.xlu0 %384
  %v387 = vmul.f32 %v369, %v385
  %v388 = vpack.c.bf16 %v387, %v387
  %390 = vrot.lane.b32.xlu0 %v388, 32
  %v391 = vpop.permute.xlu0 %390
  %v393 = vsel %vm171, %v391, 0
  %395 = vmatprep.subr.bf16.mxu0 0
  %396 = vmatpush1.bf16.msra.mxu0 %v167
  %397 = vmatprep.subr.bf16.mxu0 0
  %398 = vmatpush1.bf16.msra.mxu0 %v168
  %399 = vmatprep.subr.bf16.mxu0 0
  %400 = vmatpush1.bf16.msra.mxu0 0
  %401 = vmatprep.subr.bf16.mxu0 0
  %402 = vmatpush1.bf16.msra.mxu0 0
  %403 = vmatprep.subr.bf16.mxu0 0
  %404 = vmatpush1.bf16.msra.mxu0 0
  %405 = vmatprep.subr.bf16.mxu0 0
  %406 = vmatpush1.bf16.msra.mxu0 0
  %407 = vmatprep.subr.bf16.mxu0 0
  %408 = vmatpush1.bf16.msra.mxu0 0
  %409 = vmatprep.subr.bf16.mxu0 0
  %410 = vmatpush1.bf16.msra.mxu0 0
  %411 = vmatprep.subr.bf16.mxu0 0
  %412 = vmatpush1.bf16.msra.mxu0 0
  %413 = vmatprep.subr.bf16.mxu0 0
  %414 = vmatpush1.bf16.msra.mxu0 0
  %415 = vmatprep.subr.bf16.mxu0 0
  %416 = vmatpush1.bf16.msra.mxu0 0
  %417 = vmatprep.subr.bf16.mxu0 0
  %418 = vmatpush1.bf16.msra.mxu0 0
  %419 = vmatprep.subr.bf16.mxu0 0
  %420 = vmatpush1.bf16.msra.mxu0 0
  %421 = vmatprep.subr.bf16.mxu0 0
  %422 = vmatpush1.bf16.msra.mxu0 0
  %423 = vmatprep.subr.bf16.mxu0 0
  %424 = vmatpush1.bf16.msra.mxu0 0
  %425 = vmatprep.subr.bf16.mxu0 0
  %426 = vmatpush1.bf16.msra.mxu0 0
  %427 = vmatprep.mubr.bf16.mxu0 0
  %428 = vmatmul.mubr.bf16.gmra.mrb[0].mxu0 %v393
  %v429 = vpop.f32.mrb[0].mxu0
  %v430 = vadd.f32 0.0, %v429
  %v431 = vpop.f32.mrb[0].mxu0
  %v432 = vpop.f32.mrb[0].mxu0
  %v433 = vpop.f32.mrb[0].mxu0
  %434 = vdwg.mxu0
  %v435 = vadd.f32 %v139, %v430
  %v436 = vsub.f32 0.0, %v435
  %v437 = vmul.f32 %v436, 1.442695
  %v438 = vpow.pop %v437
  %v439 = vadd.f32 %v438, 1.0
  %v440 = vrcp.pop %v439
  %v441 = vmul.f32 1.0, %v440
  %v442 = vtanh.pop %v435
  %v443 = vmul.f32 %v441, %v381
  %445 = vrot.lane.b32.xlu0 %v442, 64
  %v446 = vpop.permute.xlu0 %445
  %v448 = vmul.f32 %v441, %v446
  %450 = vrot.lane.b32.xlu0 %v448, 32
  %v451 = vpop.permute.xlu0 %450
  %v453 = vadd.f32 %v443, %v451
  %v454 = vtanh.pop %v453
  %456 = vrot.lane.b32.xlu0 %v454, 64
  %v457 = vpop.permute.xlu0 %456
  %v459 = vmul.f32 %v441, %v457
  %v460 = vpack.c.bf16 %v459, %v459
  %462 = vrot.lane.b32.xlu0 %v460, 32
  %v463 = vpop.permute.xlu0 %462
  %v465 = vsel %vm171, %v463, 0
  %467 = vmatprep.subr.bf16.mxu0 0
  %468 = vmatpush1.bf16.msra.mxu0 %v167
  %469 = vmatprep.subr.bf16.mxu0 0
  %470 = vmatpush1.bf16.msra.mxu0 %v168
  %471 = vmatprep.subr.bf16.mxu0 0
  %472 = vmatpush1.bf16.msra.mxu0 0
  %473 = vmatprep.subr.bf16.mxu0 0
  %474 = vmatpush1.bf16.msra.mxu0 0
  %475 = vmatprep.subr.bf16.mxu0 0
  %476 = vmatpush1.bf16.msra.mxu0 0
  %477 = vmatprep.subr.bf16.mxu0 0
  %478 = vmatpush1.bf16.msra.mxu0 0
  %479 = vmatprep.subr.bf16.mxu0 0
  %480 = vmatpush1.bf16.msra.mxu0 0
  %481 = vmatprep.subr.bf16.mxu0 0
  %482 = vmatpush1.bf16.msra.mxu0 0
  %483 = vmatprep.subr.bf16.mxu0 0
  %484 = vmatpush1.bf16.msra.mxu0 0
  %485 = vmatprep.subr.bf16.mxu0 0
  %486 = vmatpush1.bf16.msra.mxu0 0
  %487 = vmatprep.subr.bf16.mxu0 0
  %488 = vmatpush1.bf16.msra.mxu0 0
  %489 = vmatprep.subr.bf16.mxu0 0
  %490 = vmatpush1.bf16.msra.mxu0 0
  %491 = vmatprep.subr.bf16.mxu0 0
  %492 = vmatpush1.bf16.msra.mxu0 0
  %493 = vmatprep.subr.bf16.mxu0 0
  %494 = vmatpush1.bf16.msra.mxu0 0
  %495 = vmatprep.subr.bf16.mxu0 0
  %496 = vmatpush1.bf16.msra.mxu0 0
  %497 = vmatprep.subr.bf16.mxu0 0
  %498 = vmatpush1.bf16.msra.mxu0 0
  %499 = vmatprep.mubr.bf16.mxu0 0
  %500 = vmatmul.mubr.bf16.gmra.mrb[0].mxu0 %v465
  %v501 = vpop.f32.mrb[0].mxu0
  %v502 = vadd.f32 0.0, %v501
  %v503 = vpop.f32.mrb[0].mxu0
  %v504 = vpop.f32.mrb[0].mxu0
  %v505 = vpop.f32.mrb[0].mxu0
  %506 = vdwg.mxu0
  %v507 = vadd.f32 %v144, %v502
  %v508 = vsub.f32 0.0, %v507
  %v509 = vmul.f32 %v508, 1.442695
  %v510 = vpow.pop %v509
  %v511 = vadd.f32 %v510, 1.0
  %v512 = vrcp.pop %v511
  %v513 = vmul.f32 1.0, %v512
  %v514 = vtanh.pop %v507
  %v515 = vmul.f32 %v513, %v453
  %517 = vrot.lane.b32.xlu0 %v514, 64
  %v518 = vpop.permute.xlu0 %517
  %v520 = vmul.f32 %v513, %v518
  %522 = vrot.lane.b32.xlu0 %v520, 32
  %v523 = vpop.permute.xlu0 %522
  %v525 = vadd.f32 %v515, %v523
  %v526 = vtanh.pop %v525
  %528 = vrot.lane.b32.xlu0 %v526, 64
  %v529 = vpop.permute.xlu0 %528
  %v531 = vmul.f32 %v513, %v529
  %v532 = vpack.c.bf16 %v531, %v531
  %534 = vrot.lane.b32.xlu0 %v532, 32
  %v535 = vpop.permute.xlu0 %534
  %v537 = vsel %vm171, %v535, 0
  %539 = vmatprep.subr.bf16.mxu0 0
  %540 = vmatpush1.bf16.msra.mxu0 %v167
  %541 = vmatprep.subr.bf16.mxu0 0
  %542 = vmatpush1.bf16.msra.mxu0 %v168
  %543 = vmatprep.subr.bf16.mxu0 0
  %544 = vmatpush1.bf16.msra.mxu0 0
  %545 = vmatprep.subr.bf16.mxu0 0
  %546 = vmatpush1.bf16.msra.mxu0 0
  %547 = vmatprep.subr.bf16.mxu0 0
  %548 = vmatpush1.bf16.msra.mxu0 0
  %549 = vmatprep.subr.bf16.mxu0 0
  %550 = vmatpush1.bf16.msra.mxu0 0
  %551 = vmatprep.subr.bf16.mxu0 0
  %552 = vmatpush1.bf16.msra.mxu0 0
  %553 = vmatprep.subr.bf16.mxu0 0
  %554 = vmatpush1.bf16.msra.mxu0 0
  %555 = vmatprep.subr.bf16.mxu0 0
  %556 = vmatpush1.bf16.msra.mxu0 0
  %557 = vmatprep.subr.bf16.mxu0 0
  %558 = vmatpush1.bf16.msra.mxu0 0
  %559 = vmatprep.subr.bf16.mxu0 0
  %560 = vmatpush1.bf16.msra.mxu0 0
  %561 = vmatprep.subr.bf16.mxu0 0
  %562 = vmatpush1.bf16.msra.mxu0 0
  %563 = vmatprep.subr.bf16.mxu0 0
  %564 = vmatpush1.bf16.msra.mxu0 0
  %565 = vmatprep.subr.bf16.mxu0 0
  %566 = vmatpush1.bf16.msra.mxu0 0
  %567 = vmatprep.subr.bf16.mxu0 0
  %568 = vmatpush1.bf16.msra.mxu0 0
  %569 = vmatprep.subr.bf16.mxu0 0
  %570 = vmatpush1.bf16.msra.mxu0 0
  %571 = vmatprep.mubr.bf16.mxu0 0
  %572 = vmatmul.mubr.bf16.gmra.mrb[0].mxu0 %v537
  %v573 = vpop.f32.mrb[0].mxu0
  %v574 = vadd.f32 0.0, %v573
  %v575 = vpop.f32.mrb[0].mxu0
  %v576 = vpop.f32.mrb[0].mxu0
  %v577 = vpop.f32.mrb[0].mxu0
  %578 = vdwg.mxu0
  %v579 = vadd.f32 %v147, %v574
  %v580 = vsub.f32 0.0, %v579
  %v581 = vmul.f32 %v580, 1.442695
  %v582 = vpow.pop %v581
  %v583 = vadd.f32 %v582, 1.0
  %v584 = vrcp.pop %v583
  %v585 = vmul.f32 1.0, %v584
  %v586 = vtanh.pop %v579
  %v587 = vmul.f32 %v585, %v525
  %589 = vrot.lane.b32.xlu0 %v586, 64
  %v590 = vpop.permute.xlu0 %589
  %v592 = vmul.f32 %v585, %v590
  %594 = vrot.lane.b32.xlu0 %v592, 32
  %v595 = vpop.permute.xlu0 %594
  %v597 = vadd.f32 %v587, %v595
  %v598 = vtanh.pop %v597
  %600 = vrot.lane.b32.xlu0 %v598, 64
  %v601 = vpop.permute.xlu0 %600
  %v603 = vmul.f32 %v585, %v601
  %v604 = vpack.c.bf16 %v603, %v603
  %606 = vrot.lane.b32.xlu0 %v604, 32
  %v607 = vpop.permute.xlu0 %606
  %v609 = vsel %vm171, %v607, 0
  %611 = vmatprep.subr.bf16.mxu0 0
  %612 = vmatpush1.bf16.msra.mxu0 %v167
  %613 = vmatprep.subr.bf16.mxu0 0
  %614 = vmatpush1.bf16.msra.mxu0 %v168
  %615 = vmatprep.subr.bf16.mxu0 0
  %616 = vmatpush1.bf16.msra.mxu0 0
  %617 = vmatprep.subr.bf16.mxu0 0
  %618 = vmatpush1.bf16.msra.mxu0 0
  %619 = vmatprep.subr.bf16.mxu0 0
  %620 = vmatpush1.bf16.msra.mxu0 0
  %621 = vmatprep.subr.bf16.mxu0 0
  %622 = vmatpush1.bf16.msra.mxu0 0
  %623 = vmatprep.subr.bf16.mxu0 0
  %624 = vmatpush1.bf16.msra.mxu0 0
  %625 = vmatprep.subr.bf16.mxu0 0
  %626 = vmatpush1.bf16.msra.mxu0 0
  %627 = vmatprep.subr.bf16.mxu0 0
  %628 = vmatpush1.bf16.msra.mxu0 0
  %629 = vmatprep.subr.bf16.mxu0 0
  %630 = vmatpush1.bf16.msra.mxu0 0
  %631 = vmatprep.subr.bf16.mxu0 0
  %632 = vmatpush1.bf16.msra.mxu0 0
  %633 = vmatprep.subr.bf16.mxu0 0
  %634 = vmatpush1.bf16.msra.mxu0 0
  %635 = vmatprep.subr.bf16.mxu0 0
  %636 = vmatpush1.bf16.msra.mxu0 0
  %637 = vmatprep.subr.bf16.mxu0 0
  %638 = vmatpush1.bf16.msra.mxu0 0
  %639 = vmatprep.subr.bf16.mxu0 0
  %640 = vmatpush1.bf16.msra.mxu0 0
  %641 = vmatprep.subr.bf16.mxu0 0
  %642 = vmatpush1.bf16.msra.mxu0 0
  %643 = vmatprep.mubr.bf16.mxu0 0
  %644 = vmatmul.mubr.bf16.gmra.mrb[0].mxu0 %v609
  %v645 = vpop.f32.mrb[0].mxu0
  %v646 = vadd.f32 0.0, %v645
  %v647 = vpop.f32.mrb[0].mxu0
  %v648 = vpop.f32.mrb[0].mxu0
  %v649 = vpop.f32.mrb[0].mxu0
  %650 = vdwg.mxu0
  %v651 = vadd.f32 %v152, %v646
  %v652 = vsub.f32 0.0, %v651
  %v653 = vmul.f32 %v652, 1.442695
  %v654 = vpow.pop %v653
  %v655 = vadd.f32 %v654, 1.0
  %v656 = vrcp.pop %v655
  %v657 = vmul.f32 1.0, %v656
  %v658 = vtanh.pop %v651
  %v659 = vmul.f32 %v657, %v597
  %661 = vrot.lane.b32.xlu0 %v658, 64
  %v662 = vpop.permute.xlu0 %661
  %v664 = vmul.f32 %v657, %v662
  %666 = vrot.lane.b32.xlu0 %v664, 32
  %v667 = vpop.permute.xlu0 %666
  %v669 = vadd.f32 %v659, %v667
  %v670 = vtanh.pop %v669
  %672 = vrot.lane.b32.xlu0 %v670, 64
  %v673 = vpop.permute.xlu0 %672
  %v675 = vmul.f32 %v657, %v673
  %v676 = vpack.c.bf16 %v675, %v675
  %678 = vrot.lane.b32.xlu0 %v676, 32
  %v679 = vpop.permute.xlu0 %678
  %v681 = vsel %vm171, %v679, 0
  %683 = vmatprep.subr.bf16.mxu0 0
  %684 = vmatpush1.bf16.msra.mxu0 %v167
  %685 = vmatprep.subr.bf16.mxu0 0
  %686 = vmatpush1.bf16.msra.mxu0 %v168
  %687 = vmatprep.subr.bf16.mxu0 0
  %688 = vmatpush1.bf16.msra.mxu0 0
  %689 = vmatprep.subr.bf16.mxu0 0
  %690 = vmatpush1.bf16.msra.mxu0 0
  %691 = vmatprep.subr.bf16.mxu0 0
  %692 = vmatpush1.bf16.msra.mxu0 0
  %693 = vmatprep.subr.bf16.mxu0 0
  %694 = vmatpush1.bf16.msra.mxu0 0
  %695 = vmatprep.subr.bf16.mxu0 0
  %696 = vmatpush1.bf16.msra.mxu0 0
  %697 = vmatprep.subr.bf16.mxu0 0
  %698 = vmatpush1.bf16.msra.mxu0 0
  %699 = vmatprep.subr.bf16.mxu0 0
  %700 = vmatpush1.bf16.msra.mxu0 0
  %701 = vmatprep.subr.bf16.mxu0 0
  %702 = vmatpush1.bf16.msra.mxu0 0
  %703 = vmatprep.subr.bf16.mxu0 0
  %704 = vmatpush1.bf16.msra.mxu0 0
  %705 = vmatprep.subr.bf16.mxu0 0
  %706 = vmatpush1.bf16.msra.mxu0 0
  %707 = vmatprep.subr.bf16.mxu0 0
  %708 = vmatpush1.bf16.msra.mxu0 0
  %709 = vmatprep.subr.bf16.mxu0 0
  %710 = vmatpush1.bf16.msra.mxu0 0
  %711 = vmatprep.subr.bf16.mxu0 0
  %712 = vmatpush1.bf16.msra.mxu0 0
  %713 = vmatprep.subr.bf16.mxu0 0
  %714 = vmatpush1.bf16.msra.mxu0 0
  %715 = vmatprep.mubr.bf16.mxu0 0
  %716 = vmatmul.mubr.bf16.gmra.mrb[0].mxu0 %v681
  %v717 = vpop.f32.mrb[0].mxu0
  %v718 = vadd.f32 0.0, %v717
  %v719 = vpop.f32.mrb[0].mxu0
  %v720 = vpop.f32.mrb[0].mxu0
  %v721 = vpop.f32.mrb[0].mxu0
  %722 = vdwg.mxu0
  %v723 = vadd.f32 %v155, %v718
  %v724 = vsub.f32 0.0, %v723
  %v725 = vmul.f32 %v724, 1.442695
  %v726 = vpow.pop %v725
  %v727 = vadd.f32 %v726, 1.0
  %v728 = vrcp.pop %v727
  %v729 = vmul.f32 1.0, %v728
  %v730 = vtanh.pop %v723
  %v731 = vmul.f32 %v729, %v669
  %733 = vrot.lane.b32.xlu0 %v730, 64
  %v734 = vpop.permute.xlu0 %733
  %v736 = vmul.f32 %v729, %v734
  %738 = vrot.lane.b32.xlu0 %v736, 32
  %v739 = vpop.permute.xlu0 %738
  %v741 = vadd.f32 %v731, %v739
  %v742 = vtanh.pop %v741
  %744 = vrot.lane.b32.xlu0 %v742, 64
  %v745 = vpop.permute.xlu0 %744
  %v747 = vmul.f32 %v729, %v745
  %v748 = vpack.c.bf16 %v747, %v747
  %v749 = vlaneseq
  %v750 = vshrl.u32 %v749, 7
  %v751 = vsub.s32 0, %v750
  %v752 = vrot.slane %v33, %v751
  %754 = vrot.lane.b32.xlu0 %v748, 32
  %v755 = vpop.permute.xlu0 %754
  %v760 = vunpack.c.l.b16 %v24
  %v761 = vunpack.c.l.b16 %v25
  %v762 = vunpack.c.l.b16 %v26
  %v763 = vunpack.c.l.b16 %v27
  %v764 = vpack.c.b16 %v761, %v760
  %v765 = vpack.c.b16 %v763, %v762
  %v769 = vsel %vm171, %v755, 0
  %771 = vmatprep.subr.bf16.mxu0 0
  %772 = vmatpush1.bf16.msra.mxu0 %v764
  %773 = vmatprep.subr.bf16.mxu0 0
  %774 = vmatpush1.bf16.msra.mxu0 %v765
  %775 = vmatprep.subr.bf16.mxu0 0
  %776 = vmatpush1.bf16.msra.mxu0 0
  %777 = vmatprep.subr.bf16.mxu0 0
  %778 = vmatpush1.bf16.msra.mxu0 0
  %779 = vmatprep.subr.bf16.mxu0 0
  %780 = vmatpush1.bf16.msra.mxu0 0
  %781 = vmatprep.subr.bf16.mxu0 0
  %782 = vmatpush1.bf16.msra.mxu0 0
  %783 = vmatprep.subr.bf16.mxu0 0
  %784 = vmatpush1.bf16.msra.mxu0 0
  %785 = vmatprep.subr.bf16.mxu0 0
  %786 = vmatpush1.bf16.msra.mxu0 0
  %787 = vmatprep.subr.bf16.mxu0 0
  %788 = vmatpush1.bf16.msra.mxu0 0
  %789 = vmatprep.subr.bf16.mxu0 0
  %790 = vmatpush1.bf16.msra.mxu0 0
  %791 = vmatprep.subr.bf16.mxu0 0
  %792 = vmatpush1.bf16.msra.mxu0 0
  %793 = vmatprep.subr.bf16.mxu0 0
  %794 = vmatpush1.bf16.msra.mxu0 0
  %795 = vmatprep.subr.bf16.mxu0 0
  %796 = vmatpush1.bf16.msra.mxu0 0
  %797 = vmatprep.subr.bf16.mxu0 0
  %798 = vmatpush1.bf16.msra.mxu0 0
  %799 = vmatprep.subr.bf16.mxu0 0
  %800 = vmatpush1.bf16.msra.mxu0 0
  %801 = vmatprep.subr.bf16.mxu0 0
  %802 = vmatpush1.bf16.msra.mxu0 0
  %803 = vmatprep.mubr.bf16.mxu0 0
  %804 = vmatmul.mubr.bf16.gmra.mrb[0].mxu0 %v769
  %v805 = vpop.f32.mrb[0].mxu0
  %v806 = vadd.f32 %v752, %v805
  %v807 = vpop.f32.mrb[0].mxu0
  %v808 = vpop.f32.mrb[0].mxu0
  %v809 = vpop.f32.mrb[0].mxu0
  %810 = vdwg.mxu0
  %vm811 = vcmp.gt.f32.partialorder %v806, 0.0
  %v812 = vmin.f32 %v806, 0.0
  %v813 = vmul.f32 %v812, 1.442695
  %v814 = vpow.pop %v813
  %v815 = vsub.f32 %v814, 1.0
  %v816 = vsel %vm811, %v806, %v815
  %v817 = vpack.c.bf16 %v816, %v816
  %v818 = vlaneseq
  %v819 = vshrl.u32 %v818, 7
  %v820 = vsub.s32 0, %v819
  %v821 = vrot.slane %v34, %v820
  %v826 = vunpack.c.l.b16 %v28
  %v827 = vunpack.c.l.b16 %v29
  %v828 = vunpack.c.l.b16 %v30
  %v829 = vunpack.c.l.b16 %v31
  %v830 = vpack.c.b16 %v827, %v826
  %v831 = vpack.c.b16 %v829, %v828
  %v835 = vsel %vm171, %v817, 0
  %837 = vmatprep.subr.bf16.mxu0 0
  %838 = vmatpush1.bf16.msra.mxu0 %v830
  %839 = vmatprep.subr.bf16.mxu0 0
  %840 = vmatpush1.bf16.msra.mxu0 %v831
  %841 = vmatprep.subr.bf16.mxu0 0
  %842 = vmatpush1.bf16.msra.mxu0 0
  %843 = vmatprep.subr.bf16.mxu0 0
  %844 = vmatpush1.bf16.msra.mxu0 0
  %845 = vmatprep.subr.bf16.mxu0 0
  %846 = vmatpush1.bf16.msra.mxu0 0
  %847 = vmatprep.subr.bf16.mxu0 0
  %848 = vmatpush1.bf16.msra.mxu0 0
  %849 = vmatprep.subr.bf16.mxu0 0
  %850 = vmatpush1.bf16.msra.mxu0 0
  %851 = vmatprep.subr.bf16.mxu0 0
  %852 = vmatpush1.bf16.msra.mxu0 0
  %853 = vmatprep.subr.bf16.mxu0 0
  %854 = vmatpush1.bf16.msra.mxu0 0
  %855 = vmatprep.subr.bf16.mxu0 0
  %856 = vmatpush1.bf16.msra.mxu0 0
  %857 = vmatprep.subr.bf16.mxu0 0
  %858 = vmatpush1.bf16.msra.mxu0 0
  %859 = vmatprep.subr.bf16.mxu0 0
  %860 = vmatpush1.bf16.msra.mxu0 0
  %861 = vmatprep.subr.bf16.mxu0 0
  %862 = vmatpush1.bf16.msra.mxu0 0
  %863 = vmatprep.subr.bf16.mxu0 0
  %864 = vmatpush1.bf16.msra.mxu0 0
  %865 = vmatprep.subr.bf16.mxu0 0
  %866 = vmatpush1.bf16.msra.mxu0 0
  %867 = vmatprep.subr.bf16.mxu0 0
  %868 = vmatpush1.bf16.msra.mxu0 0
  %869 = vmatprep.mubr.bf16.mxu0 0
  %870 = vmatmul.mubr.bf16.gmra.mrb[0].mxu0 %v835
  %v871 = vpop.f32.mrb[0].mxu0
  %v872 = vadd.f32 %v821, %v871
  %v873 = vpop.f32.mrb[0].mxu0
  %v874 = vpop.f32.mrb[0].mxu0
  %v875 = vpop.f32.mrb[0].mxu0
  %876 = vdwg.mxu0
  %v877 = vld [vmem:[%s1 + $0x10] sm:$0xff]
  %v878 = vsub.f32 0.0, %v35
  %v879 = vmul.f32 %v878, 1.442695
  %v880 = vpow.pop %v879
  %v881 = vsub.f32 %v877, %v872
  %v882 = vlaneseq
  %v883 = vshrl.u32 %v882, 7
  %v884 = vsub.s32 0, %v883
  %v885 = vrot.slane %v880, %v884
  %v886 = vmul.f32 %v881, %v885
  %v887 = vmul.f32 %v886, -0.5
  %v888 = vmul.f32 %v887, %v886
  %v889 = vlaneseq
  %v890 = vshrl.u32 %v889, 7
  %v891 = vsub.s32 0, %v890
  %v892 = vrot.slane %v35, %v891
  %v893 = vsub.f32 %v888, %v892
  %v894 = vsub.f32 %v893, 0.9189385
  %v895 = vlaneseq
  %v896 = vand.u32 %v895, 127
  %vm897 = vcmp.lt.s32.totalorder %v896, 4
  %v898 = vsel %vm897, %v894, 0.0
  %v899 = vsel %vm171, %v898, 0.0
  %900 = vadd.xlane.f32.xlu0 %v899
  %v901 = vpop.xlane.xlu0 %900
  %vm902 = vcmp.eq.s32.totalorder %v896, 4
  %v903 = vsel %vm902, %v901, %v872
  %905 = vrot.lane.b32.xlu0 %v747, 32
  %v906 = vpop.permute.xlu0 %905
  %908 = vst.msk [vmem:[%s4] sm:$0xff] %vm171, %v906
  %vm909 = vcmask 523520
  %910 = vst.msk [vmem:[%s4] sm:$0xff] %vm909, %v741
  %912 = vrot.lane.b32.xlu0 %v903, 64
  %v913 = vpop.permute.xlu0 %912
  %vm915 = vcmask 1048064
  %916 = vst.msk [vmem:[%s4] sm:$0xff] %vm915, %v913
  // Predicated region
  $region18: #{lstm_gaussian_actor.1} parent=0 // pred_check
    _
  $region19: #{lstm_gaussian_actor.1} parent=0 // pred_check_branch
    %918 = sbr.rel (0) target = $region21
  $region20: #{lstm_gaussian_actor.1} parent=0 // pred_region
    _
  $region21: #{lstm_gaussian_actor.1} parent=0 // pred_fallthru
    _
  // Predicated region
  $region22: #{lstm_gaussian_actor.1} parent=0 // pred_check
    _
  $region23: #{lstm_gaussian_actor.1} parent=0 // pred_check_branch
    %920 = sbr.rel (0) target = $region25
  $region24: #{lstm_gaussian_actor.1} parent=0 // pred_region
    _
  $region25: #{lstm_gaussian_actor.1} parent=0 // pred_fallthru
    _

</llo_original>
